<compile_context>
chip_gen: v5e
topology: v5e:2x2
jax: 0.10.0
libtpu: 0.0.40
codegen_flags: <defaults>
</compile_context>

<pallas_src>
import jax
import jax.numpy as jnp
from jax.experimental import pallas as pl
from jax.experimental.pallas import tpu as pltpu

_LANES = 128
_SUBLANES = 8
_ALIGN = 64          # lcm of packed sublane counts (8 f32 / 16 bf16 / 32 int8)
_SLAB_ROWS = 64      # rows per inner-loop step (keeps temporaries in vregs)
_DB_BUDGET = 24 << 20  # budget for all double-buffered input blocks
_MAX_TILE_ROWS = 8192  # hard cap on rows per block


def _make_l2_kernel(has_obs, has_dm, obs_weight, tile_rows):
    """Kernel specialised on which masks are present and the tile size."""
    w_minus_1 = float(obs_weight) - 1.0
    n_slabs = tile_rows // _SLAB_ROWS
    groups = _SLAB_ROWS // _SUBLANES

    def kernel(*refs):
        idx = 0
        t_ref = refs[idx]; idx += 1
        p_ref = refs[idx]; idx += 1
        om_ref = None
        dm_ref = None
        if has_obs:
            om_ref = refs[idx]; idx += 1
        if has_dm:
            dm_ref = refs[idx]; idx += 1
        num_ref = refs[idx]; idx += 1
        den_ref = refs[idx] if has_dm else None

        def slab_terms(g):
            start = pl.multiple_of(g * _SLAB_ROWS, _SLAB_ROWS)
            rows_sl = pl.ds(start, _SLAB_ROWS)
            t = t_ref[rows_sl, :].astype(jnp.float32)
            p = p_ref[rows_sl, :].astype(jnp.float32)
            diff = t - p
            err = diff * diff                              # L2: squared error
            if has_obs:
                om = om_ref[rows_sl, :].astype(jnp.float32)
                # weight = om*w - (om - 1) == om*(w - 1) + 1
                err = err * (om * w_minus_1 + 1.0)
            if has_dm:
                dm = dm_ref[rows_sl, :].astype(jnp.float32)
                num = (err * dm).reshape(groups, _SUBLANES, _LANES).sum(axis=0)
                den = dm.reshape(groups, _SUBLANES, _LANES).sum(axis=0)
                return num, den
            num = err.reshape(groups, _SUBLANES, _LANES).sum(axis=0)
            return num, None

        zeros = jnp.zeros((_SUBLANES, _LANES), jnp.float32)
        if has_dm:
            def body(g, carry):
                n_acc, d_acc = carry
                n, d = slab_terms(g)
                return n_acc + n, d_acc + d
            num, den = jax.lax.fori_loop(0, n_slabs, body, (zeros, zeros))
            num_ref[...] = num
            den_ref[...] = den
        else:
            def body(g, n_acc):
                n, _ = slab_terms(g)
                return n_acc + n
            num_ref[...] = jax.lax.fori_loop(0, n_slabs, body, zeros)

    return kernel


def _tail_sums(flats, has_obs, has_dm, obs_weight, start):
    """Plain-JAX numerator/denominator for the (small) un-tiled tail."""
    t = flats[0][start:].astype(jnp.float32)
    p = flats[1][start:].astype(jnp.float32)
    err = (t - p) ** 2
    i = 2
    if has_obs:
        om = flats[i][start:].astype(jnp.float32); i += 1
        err = err * (om * (float(obs_weight) - 1.0) + 1.0)
    if has_dm:
        dm = flats[i][start:].astype(jnp.float32)
        return jnp.sum(err * dm), jnp.sum(dm)
    return jnp.sum(err), jnp.float32(0.0)


def l2_loss(target, pred, obs_mask=None, data_mask=None, obs_weight=1.0):
    """Pallas equivalent of L2Loss.forward. Returns a float32 scalar.

    Masks may be any dtype (bool / int8 / bf16 / f32); they are upcast inside
    the kernel, so pass the narrowest dtype you have (do not pre-convert).
    """
    assert target.shape == pred.shape
    total = 1
    for d in target.shape:
        total *= d

    has_obs = obs_mask is not None
    has_dm = data_mask is not None

    streams = [target, pred]
    if has_obs:
        assert obs_mask.shape == target.shape
        streams.append(obs_mask)
    if has_dm:
        assert data_mask.shape == target.shape
        streams.append(data_mask)

    # Flatten (free reshape).  Only when the element count is not a multiple
    # of 128 do we pay a small pad-to-lane copy (see TODO at top of file).
    flats = [jnp.ravel(s) for s in streams]
    rem = total % _LANES
    if rem:
        pad = _LANES - rem
        # Zero padding is exact: (0-0)^2 == 0, padded data_mask entries are 0.
        flats = [jnp.pad(f, (0, pad)) for f in flats]
    padded_total = flats[0].shape[0]
    rows = padded_total // _LANES

    # Bandwidth-aware tile sizing (rows rounded to the 64-row dtype lcm).
    bytes_per_row = _LANES * sum(int(jnp.dtype(f.dtype).itemsize) for f in flats)
    tgt_rows = (_DB_BUDGET // (2 * bytes_per_row)) // _ALIGN * _ALIGN
    tgt_rows = max(_ALIGN, min(_MAX_TILE_ROWS, tgt_rows))
    grid_n = max(1, -(-rows // tgt_rows))
    tile_rows = (rows // grid_n) // _ALIGN * _ALIGN
    bulk_rows = grid_n * tile_rows
    bulk_elems = bulk_rows * _LANES

    num = jnp.float32(0.0)
    den_masked = jnp.float32(0.0)

    if tile_rows > 0:
        mats = [f.reshape(rows, _LANES) for f in flats]

        tile_spec = pl.BlockSpec((tile_rows, _LANES), lambda i: (i, 0))
        in_specs = [tile_spec] * len(mats)

        part_shape = jax.ShapeDtypeStruct((grid_n * _SUBLANES, _LANES),
                                          jnp.float32)
        part_spec = pl.BlockSpec((_SUBLANES, _LANES), lambda i: (i, 0))
        out_shape = (part_shape, part_shape) if has_dm else (part_shape,)
        out_specs = (part_spec, part_spec) if has_dm else (part_spec,)

        n_outs = 2 if has_dm else 1
        out_bytes = grid_n * _SUBLANES * _LANES * 4 * n_outs
        flops_per_elem = 3 + (2 if has_obs else 0) + (3 if has_dm else 0)
        cost = pl.CostEstimate(
            flops=bulk_elems * flops_per_elem,
            transcendentals=0,
            bytes_accessed=bulk_rows * bytes_per_row + out_bytes,
        )
        # Double-buffered input blocks + small partial-sum blocks + headroom.
        vmem_limit = int(min(48 << 20,
                             2 * tile_rows * bytes_per_row + (4 << 20)))

        outs = pl.pallas_call(
            _make_l2_kernel(has_obs, has_dm, obs_weight, tile_rows),
            out_shape=out_shape,
            grid_spec=pltpu.PrefetchScalarGridSpec(
                num_scalar_prefetch=0,
                grid=(grid_n,),
                in_specs=in_specs,
                out_specs=out_specs,
            ),
            compiler_params=pltpu.CompilerParams(
                # Independent partial-sum blocks -> megacore-safe on v7x.
                dimension_semantics=("parallel",),
                vmem_limit_bytes=vmem_limit,
            ),
            cost_estimate=cost,
        )(*mats)

        num = num + jnp.sum(outs[0])
        if has_dm:
            den_masked = den_masked + jnp.sum(outs[1])

    if bulk_elems < padded_total:
        # Small un-tiled tail (< one tile of rows + padded zeros) in plain JAX.
        t_num, t_den = _tail_sums(flats, has_obs, has_dm, obs_weight,
                                  bulk_elems)
        num = num + t_num
        if has_dm:
            den_masked = den_masked + t_den

    # Note: if data_mask sums to zero this divides by zero, matching the
    # reference semantics.
    den = den_masked if has_dm else jnp.float32(total)
    return (num / den).astype(jnp.float32)


def _reference(target, pred, obs_mask=None, data_mask=None, obs_weight=1.0):
    error = (target.astype(jnp.float32) - pred.astype(jnp.float32)) ** 2
    if obs_mask is not None:
        om = obs_mask.astype(jnp.float32)
        error = error * (om * obs_weight - (om - 1.0))
    if data_mask is None:
        return jnp.mean(error)
    dm = data_mask.astype(jnp.float32)
    return jnp.sum(error * dm) / jnp.sum(dm)


if __name__ == "__main__":
    key = jax.random.PRNGKey(0)
    ks = jax.random.split(key, 10)
    obs_weight = 2.0
    checks = []

    # NCHW inputs, as the PyTorch module would receive (128-aligned count ->
    # fully zero-copy kernel path).
    shape = (2, 4, 32, 32)
    target = jax.random.normal(ks[0], shape, dtype=jnp.float32)
    pred = jax.random.normal(ks[1], shape, dtype=jnp.float32)
    obs_mask = (jax.random.uniform(ks[2], shape) > 0.5).astype(jnp.float32)
    data_mask = (jax.random.uniform(ks[3], shape) > 0.3).astype(jnp.float32)

    # Case 1: no masks (plain mean of squared error).
    checks.append((l2_loss(target, pred, obs_weight=obs_weight),
                   _reference(target, pred, obs_weight=obs_weight)))
    # Case 2: obs_mask only.
    checks.append((l2_loss(target, pred, obs_mask=obs_mask,
                           obs_weight=obs_weight),
                   _reference(target, pred, obs_mask=obs_mask,
                              obs_weight=obs_weight)))
    # Case 3: both masks.
    checks.append((l2_loss(target, pred, obs_mask=obs_mask,
                           data_mask=data_mask, obs_weight=obs_weight),
                   _reference(target, pred, obs_mask=obs_mask,
                              data_mask=data_mask, obs_weight=obs_weight)))

    # Case 4: awkward non-128-aligned element count -> kernel bulk + JAX tail.
    shape2 = (3, 5, 33, 35)
    t2 = jax.random.normal(ks[4], shape2, dtype=jnp.float32)
    p2 = jax.random.normal(ks[5], shape2, dtype=jnp.float32)
    dm2 = (jax.random.uniform(ks[6], shape2) > 0.3).astype(jnp.float32)
    checks.append((l2_loss(t2, p2, data_mask=dm2, obs_weight=obs_weight),
                   _reference(t2, p2, data_mask=dm2, obs_weight=obs_weight)))

    # Case 5: bf16 target/pred (packed dtype, zero-copy bulk + JAX row tail),
    # obs_mask kept in its own dtype (upcast happens in-kernel).
    shape3 = (2, 8, 40, 72)
    t3 = jax.random.normal(ks[7], shape3, dtype=jnp.bfloat16)
    p3 = jax.random.normal(ks[8], shape3, dtype=jnp.bfloat16)
    om3 = (jax.random.uniform(ks[9], shape3) > 0.5).astype(jnp.float32)
    checks.append((l2_loss(t3, p3, obs_mask=om3, obs_weight=obs_weight),
                   _reference(t3, p3, obs_mask=om3, obs_weight=obs_weight)))

    for out, ref in checks:
        out = jax.block_until_ready(out)
        assert jnp.allclose(out, ref, rtol=1e-4, atol=1e-5), (out, ref)

    print("KERNEL_OK")
</pallas_src>

<mosaic_0001>
module attributes {stable_mosaic.version = 11 : i64} {
  func.func @kernel(%arg0: i32, %arg1: memref<64x128xf32, #tpu.memory_space<vmem>>, %arg2: memref<64x128xf32, #tpu.memory_space<vmem>>, %arg3: memref<8x128xf32, #tpu.memory_space<vmem>>) attributes {dimension_semantics = [#tpu.dimension_semantics<parallel>], iteration_bounds = array<i64: 1>, scalar_prefetch = 0 : i64, scratch_operands = 0 : i64, tpu.core_type = #tpu.core_type<tc>, window_params = [{transform_indices = @transform_0, window_bounds = array<i64: 64, 128>}, {transform_indices = @transform_1, window_bounds = array<i64: 64, 128>}, {transform_indices = @transform_2, window_bounds = array<i64: 8, 128>}]} {
    %cst = arith.constant 0.000000e+00 : f32
    %0 = vector.broadcast %cst : f32 to vector<8x128xf32>
    %c0_i32 = arith.constant 0 : i32
    %c64_i32 = arith.constant 64 : i32
    %1 = arith.muli %c0_i32, %c64_i32 : i32
    %2 = tpu.assume_multiple %1, 64 : i32
    %3 = arith.index_cast %2 : i32 to index
    %c0 = arith.constant 0 : index
    %4 = vector.load %arg1[%3, %c0] : memref<64x128xf32, #tpu.memory_space<vmem>>, vector<64x128xf32>
    %5 = arith.index_cast %2 : i32 to index
    %c0_0 = arith.constant 0 : index
    %6 = vector.load %arg2[%5, %c0_0] : memref<64x128xf32, #tpu.memory_space<vmem>>, vector<64x128xf32>
    %7 = arith.subf %4, %6 : vector<64x128xf32>
    %8 = arith.mulf %7, %7 : vector<64x128xf32>
    %9 = vector.shape_cast %8 : vector<64x128xf32> to vector<8x8x128xf32>
    %cst_1 = arith.constant dense<0.000000e+00> : vector<8x128xf32>
    %10 = vector.multi_reduction <add>, %9, %cst_1 [0] : vector<8x8x128xf32> to vector<8x128xf32>
    %11 = arith.addf %0, %10 : vector<8x128xf32>
    %c1_i32 = arith.constant 1 : i32
    %c0_2 = arith.constant 0 : index
    %c0_3 = arith.constant 0 : index
    %12 = vector.load %arg3[%c0_2, %c0_3] : memref<8x128xf32, #tpu.memory_space<vmem>>, vector<8x128xf32>
    tpu.vector_store %arg3[%c0_2, %c0_3], %11 {strides = array<i32>} : memref<8x128xf32, #tpu.memory_space<vmem>>, vector<8x128xf32>,
    return
  }
  func.func @transform_0(%arg0: i32) -> (i32, i32) {
    %c0_i32 = arith.constant 0 : i32
    %c0_i32_0 = arith.constant 0 : i32
    return %arg0, %c0_i32 : i32, i32
  }
  func.func @transform_1(%arg0: i32) -> (i32, i32) {
    %c0_i32 = arith.constant 0 : i32
    %c0_i32_0 = arith.constant 0 : i32
    return %arg0, %c0_i32 : i32, i32
  }
  func.func @transform_2(%arg0: i32) -> (i32, i32) {
    %c0_i32 = arith.constant 0 : i32
    %c0_i32_0 = arith.constant 0 : i32
    return %arg0, %c0_i32 : i32, i32
  }
}

</mosaic_0001>

<llo_original>
// kernel: tpu_custom_call.1
$region0: #{tpu_custom_call.1}
  #allocation0 [shape = 'u32[]', space=smem, size = 0x4, offset = 0x4, fixed_abs, tag = 'smem constant byte address 0x4 - core index']
  #allocation1 [shape = 'u32[72,128]{1,0:T(1,128)}', space=vmem, size = 0x9000, scoped, tag = 'internal scratch']
  %s0 = inlined_call_operand.hbm [shape: f32[64,128], index: 0, kind: input, shape index: {}]
  %s1 = inlined_call_operand.hbm [shape: f32[64,128], index: 1, kind: input, shape index: {}]
  %s2 = inlined_call_operand.hbm [shape: f32[8,128], index: 2, kind: output, shape index: {}]
  %s3 = sld [smem:[#allocation0]]
  $region26: #{tpu_custom_call.1} parent=0
    _
  %s5 = ssub.s32 1, %s3
  %s6 = scalar_select 0, %s5, %s3
  $region1: #{tpu_custom_call.1} parent=0
    #allocation2 [shape = 'u8[32768]{0}', space=vmem, size = 0x8000, scoped, tag = 'input window, operand 0, single buffered']
    #allocation3 [shape = 's32[1]{0}', space=sflag, size = 0x4, scoped, tag = 'scoped memory for tpu_custom_call.1']
    #allocation4 [shape = 's32[1]{0}', space=sflag, size = 0x4, scoped, tag = 'scoped memory for tpu_custom_call.1']
    #allocation5 [shape = 'u8[32768]{0}', space=vmem, size = 0x8000, scoped, tag = 'input window, operand 1, single buffered']
    #allocation6 [shape = 's32[1]{0}', space=sflag, size = 0x4, scoped, tag = 'scoped memory for tpu_custom_call.1']
    #allocation7 [shape = 'u8[4096]{0}', space=vmem, size = 0x1000, scoped, tag = 'output window, operand 0, single buffered']
    %7 = vsyncpa [#allocation3], 0
    %8 = vsyncpa [#allocation6], 0
    %9 = vsyncpa [#allocation4], 0
    // Predicated region
    $region2: #{tpu_custom_call.1} parent=1 // pred_check
      _
    $region3: #{tpu_custom_call.1} parent=1 // pred_check_branch
      %11 = sbr.rel (0) target = $region5
    $region4: #{tpu_custom_call.1} parent=1 // pred_region
      %13 = vsyncadd [#allocation3], 0
      %s14 = sshll.u32 %s0, 4
      %s15 = int_to_ptr.hbm [resolvable:$true] %s14
      %s16 = sshll.u32 [#allocation2], 4
      %s17 = int_to_ptr.vmem [resolvable:$true] %s16
      %22 = dma.hbm_to_vmem [thread:$0]  %s15, 1024, %s17, [#allocation3], 128, 128, 8
    $region5: #{tpu_custom_call.1} parent=1 // pred_fallthru
      _
    // Predicated region
    $region6: #{tpu_custom_call.1} parent=1 // pred_check
      _
    $region7: #{tpu_custom_call.1} parent=1 // pred_check_branch
      %24 = sbr.rel (0) target = $region9
    $region8: #{tpu_custom_call.1} parent=1 // pred_region
      %26 = vsyncadd [#allocation6], 0
      %s27 = sshll.u32 %s1, 4
      %s28 = int_to_ptr.hbm [resolvable:$true] %s27
      %s29 = sshll.u32 [#allocation5], 4
      %s30 = int_to_ptr.vmem [resolvable:$true] %s29
      %35 = dma.hbm_to_vmem [thread:$0]  %s28, 1024, %s30, [#allocation6], 128, 128, 8
    $region9: #{tpu_custom_call.1} parent=1 // pred_fallthru
      _
    // Predicated region
    $region10: #{tpu_custom_call.1} parent=1 // pred_check
      _
    $region11: #{tpu_custom_call.1} parent=1 // pred_check_branch
      %37 = sbr.rel (0) target = $region13
    $region12: #{tpu_custom_call.1} parent=1 // pred_region
      %39 = dma.done [#allocation3], 1024
    $region13: #{tpu_custom_call.1} parent=1 // pred_fallthru
      _
    // Predicated region
    $region14: #{tpu_custom_call.1} parent=1 // pred_check
      _
    $region15: #{tpu_custom_call.1} parent=1 // pred_check_branch
      %41 = sbr.rel (0) target = $region17
    $region16: #{tpu_custom_call.1} parent=1 // pred_region
      %43 = dma.done [#allocation6], 1024
    $region17: #{tpu_custom_call.1} parent=1 // pred_fallthru
      _
    %v44 = vld [vmem:[#allocation2] sm:$0xff]
    %v45 = vld [vmem:[#allocation2 + $0x8] sm:$0xff]
    %v46 = vld [vmem:[#allocation2 + $0x10] sm:$0xff]
    %v47 = vld [vmem:[#allocation2 + $0x18] sm:$0xff]
    %v48 = vld [vmem:[#allocation2 + $0x20] sm:$0xff]
    %v49 = vld [vmem:[#allocation2 + $0x28] sm:$0xff]
    %v50 = vld [vmem:[#allocation2 + $0x30] sm:$0xff]
    %v51 = vld [vmem:[#allocation2 + $0x38] sm:$0xff]
    %v52 = vld [vmem:[#allocation5] sm:$0xff]
    %v53 = vld [vmem:[#allocation5 + $0x8] sm:$0xff]
    %v54 = vld [vmem:[#allocation5 + $0x10] sm:$0xff]
    %v55 = vld [vmem:[#allocation5 + $0x18] sm:$0xff]
    %v56 = vld [vmem:[#allocation5 + $0x20] sm:$0xff]
    %v57 = vld [vmem:[#allocation5 + $0x28] sm:$0xff]
    %v58 = vld [vmem:[#allocation5 + $0x30] sm:$0xff]
    %v59 = vld [vmem:[#allocation5 + $0x38] sm:$0xff]
    %v60 = vsub.f32 %v44, %v52
    %v61 = vsub.f32 %v45, %v53
    %v62 = vsub.f32 %v46, %v54
    %v63 = vsub.f32 %v47, %v55
    %v64 = vsub.f32 %v48, %v56
    %v65 = vsub.f32 %v49, %v57
    %v66 = vsub.f32 %v50, %v58
    %v67 = vsub.f32 %v51, %v59
    %v68 = vmul.f32 %v60, %v60
    %v69 = vmul.f32 %v61, %v61
    %v70 = vmul.f32 %v62, %v62
    %v71 = vmul.f32 %v63, %v63
    %v72 = vmul.f32 %v64, %v64
    %v73 = vmul.f32 %v65, %v65
    %v74 = vmul.f32 %v66, %v66
    %v75 = vmul.f32 %v67, %v67
    %v76 = vadd.f32 %v68, %v69
    %v77 = vadd.f32 %v76, %v70
    %v78 = vadd.f32 %v77, %v71
    %v79 = vadd.f32 %v78, %v72
    %v80 = vadd.f32 %v79, %v73
    %v81 = vadd.f32 %v80, %v74
    %v82 = vadd.f32 %v81, %v75
    %v83 = vadd.f32 %v82, 0.0
    %84 = vst [vmem:[#allocation7] sm:$0xff] %v83
    // Predicated region
    $region18: #{tpu_custom_call.1} parent=1 // pred_check
      _
    $region19: #{tpu_custom_call.1} parent=1 // pred_check_branch
      %86 = sbr.rel (0) target = $region21
    $region20: #{tpu_custom_call.1} parent=1 // pred_region
      %88 = vsyncadd [#allocation4], 0
      %s90 = sshll.u32 [#allocation7], 4
      %s91 = int_to_ptr.vmem [resolvable:$true] %s90
      %s92 = sshll.u32 %s2, 4
      %s93 = int_to_ptr.hbm [resolvable:$true] %s92
      %95 = dma.vmem_to_hbm [thread:$0]  %s91, 128, %s93, [#allocation4]
    $region21: #{tpu_custom_call.1} parent=1 // pred_fallthru
      _
    // Predicated region
    $region22: #{tpu_custom_call.1} parent=1 // pred_check
      _
    $region23: #{tpu_custom_call.1} parent=1 // pred_check_branch
      %97 = sbr.rel (0) target = $region25
    $region24: #{tpu_custom_call.1} parent=1 // pred_region
      %99 = dma.done [#allocation4], 128
    $region25: #{tpu_custom_call.1} parent=1 // pred_fallthru
      _
    %100 = vsyncpa [#allocation3], 1
    %101 = vsyncpa [#allocation6], 1
    %102 = vsyncpa [#allocation4], 1

</llo_original>
